<compile_context>
chip_gen: v5e
topology: v5e:2x2
jax: 0.10.0
libtpu: 0.0.40
codegen_flags: <defaults>
</compile_context>

<pallas_src>
import jax
import jax.numpy as jnp
from jax.experimental import pallas as pl
from jax.experimental.pallas import tpu as pltpu


_MIN_CHUNK_BYTES = 256 * 1024   # don't split chunks below 256 KiB each
_MAX_OUTSTANDING = 4            # at most 4 concurrent chunk DMAs


def _make_dma_copy_kernel(chunks):
    """Kernel issuing one HBM->HBM async copy per static (start, size) chunk."""
    whole = len(chunks) == 1

    def kernel(x_hbm, o_hbm, sem):
        copies = []
        for idx, (start, size) in enumerate(chunks):
            if whole:
                src, dst = x_hbm, o_hbm                      # whole-array DMA
            else:
                src = x_hbm.at[pl.ds(start, size)]           # static leading-dim slice
                dst = o_hbm.at[pl.ds(start, size)]
            cp = pltpu.make_async_copy(src, dst, sem.at[idx])
            cp.start()
            copies.append(cp)
        # All chunk DMAs are in flight before the first wait -> they overlap.
        for cp in copies:
            cp.wait()

    return kernel


def _identity_copy_pallas(x):
    """Bit-exact materialised copy of `x` via chunked HBM->HBM DMA."""
    if x.size == 0:
        return x

    orig_shape = x.shape
    squeeze_back = False
    if x.ndim == 0:
        x = x.reshape(1)
        squeeze_back = True

    leading = x.shape[0]
    total_bytes = x.size * x.dtype.itemsize
    n_chunks = int(max(1, min(_MAX_OUTSTANDING, leading,
                              total_bytes // _MIN_CHUNK_BYTES)))

    # Near-equal static chunk boundaries along the leading axis.
    base, rem = divmod(leading, n_chunks)
    chunks, start = [], 0
    for i in range(n_chunks):
        size = base + (1 if i < rem else 0)
        chunks.append((start, size))
        start += size

    out = pl.pallas_call(
        _make_dma_copy_kernel(chunks),
        out_shape=jax.ShapeDtypeStruct(x.shape, x.dtype),
        in_specs=[pl.BlockSpec(memory_space=pl.ANY)],   # raw HBM ref, no auto-DMA
        out_specs=pl.BlockSpec(memory_space=pl.ANY),    # DMA writes straight to HBM
        scratch_shapes=[pltpu.SemaphoreType.DMA((n_chunks,))],
        compiler_params=pltpu.CompilerParams(has_side_effects=True),
    )(x)

    if squeeze_back:
        out = out.reshape(orig_shape)
    return out


def lambda_forward(x, f=None, *, materialize=False):
    """Pallas implementation of Lambda(f)(x).

    With the default constructor argument (f=None) the forward is the
    identity; the fastest implementation is returning the input with zero
    HBM traffic (default).  Pass `materialize=True` to force an independent
    copy, produced by a chunked HBM->HBM DMA kernel (no VMEM staging).
    """
    if f is not None:
        # TODO(synk): an arbitrary user-supplied Python callable cannot be
        # generically lowered to a fixed Pallas kernel; apply it directly.
        return f(x)
    if not materialize:
        # Identity short-circuit: no copy, no HBM read/write, no launch cost.
        return x
    return _identity_copy_pallas(x)


if __name__ == "__main__":
    key = jax.random.PRNGKey(0)
    k1, k2, k3 = jax.random.split(key, 3)

    # NCHW-style conv feature map, consistent with how Lambda is used.
    x = jax.random.normal(k1, (2, 4, 16, 16), dtype=jnp.float32)

    # Default (optimal) path: pure identity, no copy, no kernel launch.
    y_fast = lambda_forward(x)
    assert y_fast.shape == x.shape and y_fast.dtype == x.dtype
    assert bool(jnp.array_equal(y_fast, x))

    # Materialised path (small input -> single whole-array HBM->HBM DMA).
    y_copy = jax.block_until_ready(lambda_forward(x, materialize=True))
    assert y_copy.shape == x.shape and y_copy.dtype == x.dtype
    assert bool(jnp.array_equal(y_copy, x))

    # Larger input: exercises the multi-chunk (4 outstanding DMAs) path.
    xl = jax.random.normal(k2, (16, 128, 128), dtype=jnp.float32)   # 1 MiB
    yl = jax.block_until_ready(lambda_forward(xl, materialize=True))
    assert bool(jnp.array_equal(yl, xl))

    # Odd-sized input with no multiple-of-128 element-count factor: the old
    # fragile VMEM fallback is gone; this is now just a plain whole-array DMA.
    xo = jax.random.normal(k3, (3, 5, 7), dtype=jnp.float32)
    yo = jax.block_until_ready(lambda_forward(xo, materialize=True))
    assert bool(jnp.array_equal(yo, xo))

    # Non-default callable: Lambda(f) forward is just f(x).
    yf = lambda_forward(x, f=lambda a: a * 2.0)
    assert bool(jnp.allclose(yf, x * 2.0))

    print("KERNEL_OK")
</pallas_src>

<mosaic_0001>
module attributes {stable_mosaic.version = 11 : i64} {
  func.func @kernel(%arg0: memref<2x4x16x16xf32, #tpu.memory_space<any>>, %arg1: memref<2x4x16x16xf32, #tpu.memory_space<any>>, %arg2: memref<1x!tpu.dma_semaphore, #tpu.memory_space<semaphore_mem>>) attributes {dimension_semantics = [], scalar_prefetch = 0 : i64, scratch_operands = 1 : i64, tpu.core_type = #tpu.core_type<tc>} {
    %c0_i32 = arith.constant 0 : i32
    %0 = tpu.memref_slice %arg2[%c0_i32] : memref<1x!tpu.dma_semaphore, #tpu.memory_space<semaphore_mem>> -> memref<1x!tpu.dma_semaphore, #tpu.memory_space<semaphore_mem>>
    %1 = tpu.memref_squeeze %0 : memref<1x!tpu.dma_semaphore, #tpu.memory_space<semaphore_mem>> -> memref<!tpu.dma_semaphore, #tpu.memory_space<semaphore_mem>>
    tpu.enqueue_dma source(%arg0 : memref<2x4x16x16xf32, #tpu.memory_space<any>>) target(%arg1 : memref<2x4x16x16xf32, #tpu.memory_space<any>>) target_semaphore(%1 : memref<!tpu.dma_semaphore, #tpu.memory_space<semaphore_mem>>)
    %c0_i32_0 = arith.constant 0 : i32
    %2 = tpu.memref_slice %arg2[%c0_i32_0] : memref<1x!tpu.dma_semaphore, #tpu.memory_space<semaphore_mem>> -> memref<1x!tpu.dma_semaphore, #tpu.memory_space<semaphore_mem>>
    %3 = tpu.memref_squeeze %2 : memref<1x!tpu.dma_semaphore, #tpu.memory_space<semaphore_mem>> -> memref<!tpu.dma_semaphore, #tpu.memory_space<semaphore_mem>>
    tpu.wait_dma2 semaphore(%3 : memref<!tpu.dma_semaphore, #tpu.memory_space<semaphore_mem>>) src(%arg0 : memref<2x4x16x16xf32, #tpu.memory_space<any>>) dst(%arg1 : memref<2x4x16x16xf32, #tpu.memory_space<any>>)
    return
  }
}

</mosaic_0001>

<llo_original>
// kernel: tpu_custom_call.1
$region0: #{tpu_custom_call.1}
  #allocation0 [shape = 'u32[]', space=smem, size = 0x4, offset = 0x4, fixed_abs, tag = 'smem constant byte address 0x4 - core index']
  #allocation1 [shape = 'u32[72,128]{1,0:T(1,128)}', space=vmem, size = 0x9000, scoped, tag = 'internal scratch']
  #allocation2 [shape = 's32[1]{0}', space=sflag, size = 0x4, scoped, tag = 'scratch operand']
  #allocation3 [shape = 's32[]', space=sflag, size = 0x4, offset = 0, fixed_abs, tag = 'sflag constant byte address 0x0 - dummy sync flag']
  #allocation4 [shape = 'u32[0]{0}', space=smem, size = 0, offset = 0, fixed_abs, tag = 'smem constant byte address 0x0 - null']
  %s0 = inlined_call_operand.hbm [shape: f32[2,4,16,16], index: 0, kind: input, shape index: {}]
  %s1 = inlined_call_operand.hbm [shape: f32[2,4,16,16], index: 1, kind: output, shape index: {}]
  %s2 = sld [smem:[#allocation0]]
  $region2: #{tpu_custom_call.1} parent=0
    _
  %s4 = ssub.s32 1, %s2
  %s5 = scalar_select 0, %s4, %s2
  %s7 = sshll.u32 1, 14
  %s8 = sxor.u32 4294967295, %s7
  %s10 = sshll.u32 %s0, 4
  %s11 = int_to_ptr.hbm [resolvable:$true] %s10
  %s12 = sshll.u32 %s1, 4
  %s13 = int_to_ptr.hbm [resolvable:$true] %s12
  %16 = dma.general %s11, 2048, %s13, [#allocation2], [#allocation3], [#allocation4], 0, 0
  %s17 = smul.u32 2, 4
  %s18 = smul.u32 %s17, 16
  %s19 = smul.u32 %s18, 1
  %s20 = sshll.u32 %s19, 4
  %21 = dma.done [#allocation2], %s20
  %22 = vsyncmov [#allocation2]
  %s23 = vpop.sfrf %22
  %p24 = scmp.eq.s32.totalorder %s23, 0
  %p25 = pneg %p24
  %27 = shalt.err (%p25)

</llo_original>
